<compile_context>
chip_gen: v5e
topology: v5e:2x2
jax: 0.10.0
libtpu: 0.0.40
codegen_flags: <defaults>
</compile_context>

<pallas_src>
import numpy as np
import jax
import jax.numpy as jnp
from jax import lax
from jax.experimental import pallas as pl
from jax.experimental.pallas import tpu as pltpu


def _round_up(x, m):
    return ((x + m - 1) // m) * m


# ----------------------------- Pallas kernels --------------------------------
def _make_dense_kernel(shifts, a, b):
    """3x3 conv (zero-pad SAME) + bias + ReLU on the padded-flat layout.

    For flat position p:  out[o, p] = relu(b[o] + sum_t W_t[o,:] @ x[:, p+s_t])
    evaluated over the static window p in [a, b) (covers every interior pixel);
    the padding ring / tail are written as exact zeros so the output can be fed
    straight into the next dense layer.
    """
    def kernel(x_ref, w_ref, b_ref, m_ref, o_ref):
        x = x_ref[0]                                   # (Cin, P)
        acc = None
        for t, s in enumerate(shifts):                 # fused im2col: 9 taps
            xs = x[:, a + s:b + s]                     # (Cin, b-a) static slice
            d = jnp.dot(w_ref[t], xs, preferred_element_type=jnp.float32)
            acc = d if acc is None else acc + d
        y = jnp.maximum(acc + b_ref[...], 0.0) * m_ref[...]   # bias+ReLU+mask
        # Full-width lane-dense output block; ring/tail stay zero.
        o_ref[0] = jnp.zeros(o_ref.shape[1:], dtype=o_ref.dtype)
        o_ref[0, :, pl.ds(a, b - a)] = y.astype(o_ref.dtype)
    return kernel


def _proj_kernel(x_ref, w_ref, b_ref, r_ref, o_ref):
    """1x1 conv + bias + residual add (lane-dense, channel-major)."""
    y = jnp.dot(w_ref[...], x_ref[0], preferred_element_type=jnp.float32)
    o_ref[0] = (y + b_ref[...] + r_ref[0]).astype(o_ref.dtype)


# ------------------------------ pallas_call wrappers --------------------------
def _dense_conv(xf, w_taps, bias, mask, shifts, a, b):
    N, Cin, P = xf.shape
    T, O, _ = w_taps.shape
    L = b - a
    return pl.pallas_call(
        _make_dense_kernel(shifts, a, b),
        out_shape=jax.ShapeDtypeStruct((N, O, P), xf.dtype),
        grid_spec=pltpu.PrefetchScalarGridSpec(
            num_scalar_prefetch=0,
            grid=(N,),
            in_specs=[
                pl.BlockSpec((1, Cin, P), lambda n: (n, 0, 0)),
                pl.BlockSpec((T, O, Cin), lambda n: (0, 0, 0)),  # resident
                pl.BlockSpec((O, 1), lambda n: (0, 0)),          # resident
                pl.BlockSpec((1, L), lambda n: (0, 0)),          # resident
            ],
            out_specs=pl.BlockSpec((1, O, P), lambda n: (n, 0, 0)),
        ),
        compiler_params=pltpu.CompilerParams(
            dimension_semantics=("parallel",)),
    )(xf, w_taps, bias, mask)


def _proj_conv(xf, w1, b1, res):
    N, Cin, P = xf.shape
    C0 = w1.shape[0]
    return pl.pallas_call(
        _proj_kernel,
        out_shape=jax.ShapeDtypeStruct((N, C0, P), xf.dtype),
        grid_spec=pltpu.PrefetchScalarGridSpec(
            num_scalar_prefetch=0,
            grid=(N,),
            in_specs=[
                pl.BlockSpec((1, Cin, P), lambda n: (n, 0, 0)),
                pl.BlockSpec((C0, Cin), lambda n: (0, 0)),       # resident
                pl.BlockSpec((C0, 1), lambda n: (0, 0)),         # resident
                pl.BlockSpec((1, C0, P), lambda n: (n, 0, 0)),   # residual x0
            ],
            out_specs=pl.BlockSpec((1, C0, P), lambda n: (n, 0, 0)),
        ),
        compiler_params=pltpu.CompilerParams(
            dimension_semantics=("parallel",)),
    )(xf, w1, b1, res)


# --------------------------------- RDB forward --------------------------------
def rdb_forward(x, dense_params, proj_params, kernel_size=3):
    """RDB: [MakeDense]*L (conv3x3 + ReLU + channel concat) -> conv1x1 -> +x."""
    N, C0, H, W = x.shape
    k = kernel_size
    pad = (k - 1) // 2
    Hp, Wp = H + 2 * pad, W + 2 * pad
    S = pad * Wp + pad                 # max |tap shift|
    A, B = S, Hp * Wp - S              # compute window (spans all interior px)
    P = _round_up(Hp * Wp, 128)        # lane-dense flat length

    # Pack x into padded-flat layout (N, C0, P): zero-padded image flattened
    # row-major (stride Wp) + zero tail.  Done once; all kernels keep it.
    xp = jnp.pad(x, ((0, 0), (0, 0), (pad, pad), (pad, pad)))
    xf = jnp.pad(xp.reshape(N, C0, Hp * Wp),
                 ((0, 0), (0, 0), (0, P - Hp * Wp)))

    # Interior (non-ring) mask over the compute window [A, B).
    m2 = np.zeros((Hp, Wp), np.float32)
    m2[pad:pad + H, pad:pad + W] = 1.0
    mask = jnp.asarray(m2.reshape(-1)[A:B]).reshape(1, B - A)

    shifts = tuple((kh - pad) * Wp + (kw - pad)
                   for kh in range(k) for kw in range(k))

    feat = xf
    for (w, bias) in dense_params:                     # MakeDense layers
        O, Cin = w.shape[0], w.shape[1]
        w_taps = jnp.transpose(w, (2, 3, 0, 1)).reshape(k * k, O, Cin)
        y = _dense_conv(feat, w_taps, bias.reshape(O, 1), mask, shifts, A, B)
        feat = jnp.concatenate([feat, y], axis=1)      # torch.cat((x, out), 1)

    w1, b1 = proj_params                               # conv_1x1 + residual
    out_f = _proj_conv(feat, w1.reshape(w1.shape[0], w1.shape[1]),
                       b1.reshape(-1, 1), xf)

    # Unpack interior pixels back to NCHW (pure slicing, no transpose).
    out = out_f[:, :, :Hp * Wp].reshape(N, C0, Hp, Wp)
    return out[:, :, pad:pad + H, pad:pad + W]


# --------------------------------- reference ----------------------------------
def _reference_rdb(x, dense_params, proj_params):
    dn = ("NCHW", "OIHW", "NCHW")
    feat = x
    for (w, b) in dense_params:
        pad = (w.shape[-1] - 1) // 2
        y = lax.conv_general_dilated(feat, w, (1, 1),
                                     padding=((pad, pad), (pad, pad)),
                                     dimension_numbers=dn)
        y = jnp.maximum(y + b.reshape(1, -1, 1, 1), 0.0)
        feat = jnp.concatenate([feat, y], axis=1)
    w1, b1 = proj_params
    out = lax.conv_general_dilated(feat, w1, (1, 1), padding=((0, 0), (0, 0)),
                                   dimension_numbers=dn)
    return out + b1.reshape(1, -1, 1, 1) + x


# ----------------------------------- main --------------------------------------
if __name__ == "__main__":
    N, C0, H, W = 2, 4, 16, 16
    num_dense_layer, growth_rate, k = 3, 8, 3

    key = jax.random.PRNGKey(0)
    kx, key = jax.random.split(key)
    x = jax.random.normal(kx, (N, C0, H, W), dtype=jnp.float32)

    # PyTorch-style Conv2d init: U(-1/sqrt(fan_in), 1/sqrt(fan_in)).
    dense_params = []
    cin = C0
    for _ in range(num_dense_layer):
        kw_, kb_, key = jax.random.split(key, 3)
        bound = 1.0 / np.sqrt(cin * k * k)
        w = jax.random.uniform(kw_, (growth_rate, cin, k, k), jnp.float32,
                               -bound, bound)
        b = jax.random.uniform(kb_, (growth_rate,), jnp.float32, -bound, bound)
        dense_params.append((w, b))
        cin += growth_rate

    kw_, kb_, key = jax.random.split(key, 3)
    bound = 1.0 / np.sqrt(cin)
    w1 = jax.random.uniform(kw_, (C0, cin, 1, 1), jnp.float32, -bound, bound)
    b1 = jax.random.uniform(kb_, (C0,), jnp.float32, -bound, bound)
    proj_params = (w1, b1)

    out = jax.block_until_ready(rdb_forward(x, dense_params, proj_params, k))
    ref = jax.block_until_ready(_reference_rdb(x, dense_params, proj_params))

    assert out.shape == (N, C0, H, W), out.shape
    np.testing.assert_allclose(np.asarray(out), np.asarray(ref),
                               rtol=1e-4, atol=1e-4)
    print("KERNEL_OK")
</pallas_src>

<mosaic_0001>
module attributes {stable_mosaic.version = 11 : i64} {
  func.func @kernel(%arg0: i32, %arg1: memref<1x4x384xf32, #tpu.memory_space<vmem>>, %arg2: memref<9x8x4xf32, #tpu.memory_space<vmem>>, %arg3: memref<8x1xf32, #tpu.memory_space<vmem>>, %arg4: memref<1x286xf32, #tpu.memory_space<vmem>>, %arg5: memref<1x8x384xf32, #tpu.memory_space<vmem>>) attributes {dimension_semantics = [#tpu.dimension_semantics<parallel>], iteration_bounds = array<i64: 2>, scalar_prefetch = 0 : i64, scratch_operands = 0 : i64, tpu.core_type = #tpu.core_type<tc>, window_params = [{transform_indices = @transform_0, window_bounds = array<i64: 1, 4, 384>}, {pipeline_mode = #tpu.pipeline_mode<synchronous>, transform_indices = @transform_1, window_bounds = array<i64: 9, 8, 4>}, {pipeline_mode = #tpu.pipeline_mode<synchronous>, transform_indices = @transform_2, window_bounds = array<i64: 8, 1>}, {pipeline_mode = #tpu.pipeline_mode<synchronous>, transform_indices = @transform_3, window_bounds = array<i64: 1, 286>}, {transform_indices = @transform_4, window_bounds = array<i64: 1, 8, 384>}]} {
    %c0 = arith.constant 0 : index
    %c0_0 = arith.constant 0 : index
    %c0_1 = arith.constant 0 : index
    %0 = vector.load %arg1[%c0, %c0_0, %c0_1] : memref<1x4x384xf32, #tpu.memory_space<vmem>>, vector<1x4x384xf32>
    %1 = vector.shape_cast %0 : vector<1x4x384xf32> to vector<4x384xf32>
    %2 = vector.extract_strided_slice %1 {offsets = [0, 0], sizes = [4, 286], strides = [1, 1]} : vector<4x384xf32> to vector<4x286xf32>
    %c0_2 = arith.constant 0 : index
    %c0_3 = arith.constant 0 : index
    %c0_4 = arith.constant 0 : index
    %3 = vector.load %arg2[%c0_2, %c0_3, %c0_4] : memref<9x8x4xf32, #tpu.memory_space<vmem>>, vector<1x8x4xf32>
    %4 = vector.shape_cast %3 : vector<1x8x4xf32> to vector<8x4xf32>
    %cst = arith.constant dense<0.000000e+00> : vector<8x286xf32>
    %5 = tpu.matmul %4, %2, %cst {dimension_numbers = #tpu.dot_dimension_numbers<[1], [0], [0], [1], [0, 0, 1, 1], [], []>} : vector<8x4xf32>, vector<4x286xf32>, vector<8x286xf32> -> vector<8x286xf32>
    %6 = vector.extract_strided_slice %1 {offsets = [0, 1], sizes = [4, 286], strides = [1, 1]} : vector<4x384xf32> to vector<4x286xf32>
    %c1 = arith.constant 1 : index
    %c0_5 = arith.constant 0 : index
    %c0_6 = arith.constant 0 : index
    %7 = vector.load %arg2[%c1, %c0_5, %c0_6] : memref<9x8x4xf32, #tpu.memory_space<vmem>>, vector<1x8x4xf32>
    %8 = vector.shape_cast %7 : vector<1x8x4xf32> to vector<8x4xf32>
    %cst_7 = arith.constant dense<0.000000e+00> : vector<8x286xf32>
    %9 = tpu.matmul %8, %6, %cst_7 {dimension_numbers = #tpu.dot_dimension_numbers<[1], [0], [0], [1], [0, 0, 1, 1], [], []>} : vector<8x4xf32>, vector<4x286xf32>, vector<8x286xf32> -> vector<8x286xf32>
    %10 = arith.addf %5, %9 : vector<8x286xf32>
    %11 = vector.extract_strided_slice %1 {offsets = [0, 2], sizes = [4, 286], strides = [1, 1]} : vector<4x384xf32> to vector<4x286xf32>
    %c2 = arith.constant 2 : index
    %c0_8 = arith.constant 0 : index
    %c0_9 = arith.constant 0 : index
    %12 = vector.load %arg2[%c2, %c0_8, %c0_9] : memref<9x8x4xf32, #tpu.memory_space<vmem>>, vector<1x8x4xf32>
    %13 = vector.shape_cast %12 : vector<1x8x4xf32> to vector<8x4xf32>
    %cst_10 = arith.constant dense<0.000000e+00> : vector<8x286xf32>
    %14 = tpu.matmul %13, %11, %cst_10 {dimension_numbers = #tpu.dot_dimension_numbers<[1], [0], [0], [1], [0, 0, 1, 1], [], []>} : vector<8x4xf32>, vector<4x286xf32>, vector<8x286xf32> -> vector<8x286xf32>
    %15 = arith.addf %10, %14 : vector<8x286xf32>
    %16 = vector.extract_strided_slice %1 {offsets = [0, 18], sizes = [4, 286], strides = [1, 1]} : vector<4x384xf32> to vector<4x286xf32>
    %c3 = arith.constant 3 : index
    %c0_11 = arith.constant 0 : index
    %c0_12 = arith.constant 0 : index
    %17 = vector.load %arg2[%c3, %c0_11, %c0_12] : memref<9x8x4xf32, #tpu.memory_space<vmem>>, vector<1x8x4xf32>
    %18 = vector.shape_cast %17 : vector<1x8x4xf32> to vector<8x4xf32>
    %cst_13 = arith.constant dense<0.000000e+00> : vector<8x286xf32>
    %19 = tpu.matmul %18, %16, %cst_13 {dimension_numbers = #tpu.dot_dimension_numbers<[1], [0], [0], [1], [0, 0, 1, 1], [], []>} : vector<8x4xf32>, vector<4x286xf32>, vector<8x286xf32> -> vector<8x286xf32>
    %20 = arith.addf %15, %19 : vector<8x286xf32>
    %21 = vector.extract_strided_slice %1 {offsets = [0, 19], sizes = [4, 286], strides = [1, 1]} : vector<4x384xf32> to vector<4x286xf32>
    %c4 = arith.constant 4 : index
    %c0_14 = arith.constant 0 : index
    %c0_15 = arith.constant 0 : index
    %22 = vector.load %arg2[%c4, %c0_14, %c0_15] : memref<9x8x4xf32, #tpu.memory_space<vmem>>, vector<1x8x4xf32>
    %23 = vector.shape_cast %22 : vector<1x8x4xf32> to vector<8x4xf32>
    %cst_16 = arith.constant dense<0.000000e+00> : vector<8x286xf32>
    %24 = tpu.matmul %23, %21, %cst_16 {dimension_numbers = #tpu.dot_dimension_numbers<[1], [0], [0], [1], [0, 0, 1, 1], [], []>} : vector<8x4xf32>, vector<4x286xf32>, vector<8x286xf32> -> vector<8x286xf32>
    %25 = arith.addf %20, %24 : vector<8x286xf32>
    %26 = vector.extract_strided_slice %1 {offsets = [0, 20], sizes = [4, 286], strides = [1, 1]} : vector<4x384xf32> to vector<4x286xf32>
    %c5 = arith.constant 5 : index
    %c0_17 = arith.constant 0 : index
    %c0_18 = arith.constant 0 : index
    %27 = vector.load %arg2[%c5, %c0_17, %c0_18] : memref<9x8x4xf32, #tpu.memory_space<vmem>>, vector<1x8x4xf32>
    %28 = vector.shape_cast %27 : vector<1x8x4xf32> to vector<8x4xf32>
    %cst_19 = arith.constant dense<0.000000e+00> : vector<8x286xf32>
    %29 = tpu.matmul %28, %26, %cst_19 {dimension_numbers = #tpu.dot_dimension_numbers<[1], [0], [0], [1], [0, 0, 1, 1], [], []>} : vector<8x4xf32>, vector<4x286xf32>, vector<8x286xf32> -> vector<8x286xf32>
    %30 = arith.addf %25, %29 : vector<8x286xf32>
    %31 = vector.extract_strided_slice %1 {offsets = [0, 36], sizes = [4, 286], strides = [1, 1]} : vector<4x384xf32> to vector<4x286xf32>
    %c6 = arith.constant 6 : index
    %c0_20 = arith.constant 0 : index
    %c0_21 = arith.constant 0 : index
    %32 = vector.load %arg2[%c6, %c0_20, %c0_21] : memref<9x8x4xf32, #tpu.memory_space<vmem>>, vector<1x8x4xf32>
    %33 = vector.shape_cast %32 : vector<1x8x4xf32> to vector<8x4xf32>
    %cst_22 = arith.constant dense<0.000000e+00> : vector<8x286xf32>
    %34 = tpu.matmul %33, %31, %cst_22 {dimension_numbers = #tpu.dot_dimension_numbers<[1], [0], [0], [1], [0, 0, 1, 1], [], []>} : vector<8x4xf32>, vector<4x286xf32>, vector<8x286xf32> -> vector<8x286xf32>
    %35 = arith.addf %30, %34 : vector<8x286xf32>
    %36 = vector.extract_strided_slice %1 {offsets = [0, 37], sizes = [4, 286], strides = [1, 1]} : vector<4x384xf32> to vector<4x286xf32>
    %c7 = arith.constant 7 : index
    %c0_23 = arith.constant 0 : index
    %c0_24 = arith.constant 0 : index
    %37 = vector.load %arg2[%c7, %c0_23, %c0_24] : memref<9x8x4xf32, #tpu.memory_space<vmem>>, vector<1x8x4xf32>
    %38 = vector.shape_cast %37 : vector<1x8x4xf32> to vector<8x4xf32>
    %cst_25 = arith.constant dense<0.000000e+00> : vector<8x286xf32>
    %39 = tpu.matmul %38, %36, %cst_25 {dimension_numbers = #tpu.dot_dimension_numbers<[1], [0], [0], [1], [0, 0, 1, 1], [], []>} : vector<8x4xf32>, vector<4x286xf32>, vector<8x286xf32> -> vector<8x286xf32>
    %40 = arith.addf %35, %39 : vector<8x286xf32>
    %41 = vector.extract_strided_slice %1 {offsets = [0, 38], sizes = [4, 286], strides = [1, 1]} : vector<4x384xf32> to vector<4x286xf32>
    %c8 = arith.constant 8 : index
    %c0_26 = arith.constant 0 : index
    %c0_27 = arith.constant 0 : index
    %42 = vector.load %arg2[%c8, %c0_26, %c0_27] : memref<9x8x4xf32, #tpu.memory_space<vmem>>, vector<1x8x4xf32>
    %43 = vector.shape_cast %42 : vector<1x8x4xf32> to vector<8x4xf32>
    %cst_28 = arith.constant dense<0.000000e+00> : vector<8x286xf32>
    %44 = tpu.matmul %43, %41, %cst_28 {dimension_numbers = #tpu.dot_dimension_numbers<[1], [0], [0], [1], [0, 0, 1, 1], [], []>} : vector<8x4xf32>, vector<4x286xf32>, vector<8x286xf32> -> vector<8x286xf32>
    %45 = arith.addf %40, %44 : vector<8x286xf32>
    %c0_29 = arith.constant 0 : index
    %c0_30 = arith.constant 0 : index
    %46 = vector.load %arg3[%c0_29, %c0_30] : memref<8x1xf32, #tpu.memory_space<vmem>>, vector<8x1xf32>
    %47 = vector.broadcast %46 : vector<8x1xf32> to vector<8x286xf32>
    %48 = arith.addf %45, %47 : vector<8x286xf32>
    %cst_31 = arith.constant 0.000000e+00 : f32
    %49 = vector.broadcast %cst_31 : f32 to vector<8x286xf32>
    %50 = arith.maximumf %48, %49 : vector<8x286xf32>
    %c0_32 = arith.constant 0 : index
    %c0_33 = arith.constant 0 : index
    %51 = vector.load %arg4[%c0_32, %c0_33] : memref<1x286xf32, #tpu.memory_space<vmem>>, vector<1x286xf32>
    %52 = vector.broadcast %51 : vector<1x286xf32> to vector<8x286xf32>
    %53 = arith.mulf %50, %52 : vector<8x286xf32>
    %cst_34 = arith.constant 0.000000e+00 : f32
    %54 = vector.broadcast %cst_34 : f32 to vector<8x384xf32>
    %c0_35 = arith.constant 0 : index
    %c0_36 = arith.constant 0 : index
    %c0_37 = arith.constant 0 : index
    %55 = vector.load %arg5[%c0_35, %c0_36, %c0_37] : memref<1x8x384xf32, #tpu.memory_space<vmem>>, vector<1x8x384xf32>
    %56 = vector.shape_cast %55 : vector<1x8x384xf32> to vector<8x384xf32>
    %57 = vector.shape_cast %54 : vector<8x384xf32> to vector<1x8x384xf32>
    tpu.vector_store %arg5[%c0_35, %c0_36, %c0_37], %57 {strides = array<i32>} : memref<1x8x384xf32, #tpu.memory_space<vmem>>, vector<1x8x384xf32>,
    %c0_38 = arith.constant 0 : index
    %c0_39 = arith.constant 0 : index
    %c19 = arith.constant 19 : index
    %58 = vector.load %arg5[%c0_38, %c0_39, %c19] : memref<1x8x384xf32, #tpu.memory_space<vmem>>, vector<1x8x286xf32>
    %59 = vector.shape_cast %58 : vector<1x8x286xf32> to vector<8x286xf32>
    %60 = vector.shape_cast %53 : vector<8x286xf32> to vector<1x8x286xf32>
    tpu.vector_store %arg5[%c0_38, %c0_39, %c19], %60 {strides = array<i32>} : memref<1x8x384xf32, #tpu.memory_space<vmem>>, vector<1x8x286xf32>,
    return
  }
  func.func @transform_0(%arg0: i32) -> (i32, i32, i32) {
    %c0_i32 = arith.constant 0 : i32
    %c0_i32_0 = arith.constant 0 : i32
    %c0_i32_1 = arith.constant 0 : i32
    return %arg0, %c0_i32, %c0_i32_0 : i32, i32, i32
  }
  func.func @transform_1(%arg0: i32) -> (i32, i32, i32) {
    %c0_i32 = arith.constant 0 : i32
    %c0_i32_0 = arith.constant 0 : i32
    %c0_i32_1 = arith.constant 0 : i32
    %c0_i32_2 = arith.constant 0 : i32
    return %c0_i32, %c0_i32_0, %c0_i32_1 : i32, i32, i32
  }
  func.func @transform_2(%arg0: i32) -> (i32, i32) {
    %c0_i32 = arith.constant 0 : i32
    %c0_i32_0 = arith.constant 0 : i32
    %c0_i32_1 = arith.constant 0 : i32
    return %c0_i32, %c0_i32_0 : i32, i32
  }
  func.func @transform_3(%arg0: i32) -> (i32, i32) {
    %c0_i32 = arith.constant 0 : i32
    %c0_i32_0 = arith.constant 0 : i32
    %c0_i32_1 = arith.constant 0 : i32
    return %c0_i32, %c0_i32_0 : i32, i32
  }
  func.func @transform_4(%arg0: i32) -> (i32, i32, i32) {
    %c0_i32 = arith.constant 0 : i32
    %c0_i32_0 = arith.constant 0 : i32
    %c0_i32_1 = arith.constant 0 : i32
    return %arg0, %c0_i32, %c0_i32_0 : i32, i32, i32
  }
}

</mosaic_0001>

<llo_original>
// kernel: tpu_custom_call.1
$region0: #{tpu_custom_call.1}
  #allocation0 [shape = 'u32[]', space=smem, size = 0x4, offset = 0x4, fixed_abs, tag = 'smem constant byte address 0x4 - core index']
  #allocation1 [shape = 'u32[72,128]{1,0:T(1,128)}', space=vmem, size = 0x9000, scoped, tag = 'internal scratch']
  %s0 = inlined_call_operand.vmem [shape: f32[2,4,384], index: 0, kind: input, shape index: {}]
  %s1 = inlined_call_operand.vmem [shape: f32[9,8,4], index: 1, kind: input, shape index: {}]
  %s2 = inlined_call_operand.vmem [shape: f32[8,1], index: 2, kind: input, shape index: {}]
  %s3 = inlined_call_operand.vmem [shape: f32[1,286], index: 3, kind: input, shape index: {}]
  %s4 = inlined_call_operand.hbm [shape: f32[2,8,384], index: 4, kind: output, shape index: {}]
  %s5 = sld [smem:[#allocation0]]
  $region49: #{tpu_custom_call.1} parent=0
    _
  %s7 = ssub.s32 1, %s5
  %s8 = scalar_select 0, %s7, %s5
  $region1: #{tpu_custom_call.1} parent=0
    #allocation2 [shape = 'u8[24576]{0}', space=vmem, size = 0x6000, scoped, tag = 'output window, operand 0']
    #allocation3 [shape = 's32[2]{0}', space=sflag, size = 0x8, scoped, tag = 'scoped memory for tpu_custom_call.1']
    %9 = vsyncpa [#allocation3], 0
    %s10 = scalar_lea.sflag [#allocation3], 1
    %11 = vsyncpa %s10, 0
    loop: start=0, step=1, limit=4
    $region2: #{tpu_custom_call.1} parent=1 // loop_pre_header
      _
    $region3: #{tpu_custom_call.1} parent=1 // loop_header
      %s13 = sphi 0, %s17
      %p14 = scmp.ge.s32.totalorder %s13, 4
      %s23 = sphi 0, %s25
      %s26 = sphi 0, %s23
      %s27 = sphi 0, %s26
      %s43 = sphi 0, %s27
      %s47 = sphi 0, %s47
      %s49 = sphi 0, %s47
      %s50 = sphi 0, %s49
      %s64 = sphi 0, %s50
      %s68 = sphi 0, %s68
      %s70 = sphi 0, %s68
      %s71 = sphi 0, %s70
      %s85 = sphi 0, %s71
      %s89 = sphi 0, %s89
      %s91 = sphi 0, %s89
      %s92 = sphi 0, %s91
      %s106 = sphi 0, %s92
      %s112 = sphi 0, %s114
      %s115 = sphi 0, %s112
      %s116 = sphi 0, %s115
      %s132 = sphi 0, %s116
    $region4: #{tpu_custom_call.1} parent=1 // loop_header_branch
      %16 = sbr.rel (%p14) target = $region8
    $region5: #{tpu_custom_call.1} parent=1 // loop_body
      %s18 = ssub.s32 %s13, 1
      %s19 = ssub.s32 %s13, 2
      %s20 = sadd.s32 %s13, 1
      %s21 = ssub.s32 %s13, %s20
      %p22 = scmp.eq.s32.totalorder %s21, 0
      %s24 = sadd.s32 %s23, 1
      %s25 = scalar_select %p22, %s23, %s24
      %p28 = pneg %p22
      %p29 = scmp.eq.s32.totalorder %s13, 1
      %p30 = por %p28, %p29
      %p31 = scmp.ne.s32.totalorder %s23, %s26
      %p32 = scmp.eq.s32.totalorder %s13, 0
      %p33 = por %p31, %p32
      %p34 = scmp.ne.s32.totalorder %s23, %s26
      %p35 = scmp.eq.s32.totalorder %s18, 1
      %p36 = por %p34, %p35
      %p37 = scmp.ne.s32.totalorder %s26, %s27
      %p38 = scmp.eq.s32.totalorder %s18, 0
      %p39 = por %p37, %p38
      %p40 = scmp.ne.s32.totalorder %s26, %s27
      %p41 = scmp.eq.s32.totalorder %s19, 1
      %p42 = por %p40, %p41
      %p44 = scmp.ne.s32.totalorder %s27, %s43
      %p45 = scmp.eq.s32.totalorder %s19, 0
      %p46 = por %p44, %p45
      %s48 = sadd.s32 %s47, 1
      %p51 = scmp.eq.s32.totalorder %s13, 1
      %p52 = scmp.ne.s32.totalorder %s47, %s49
      %p53 = scmp.eq.s32.totalorder %s13, 0
      %p54 = por %p52, %p53
      %p55 = scmp.ne.s32.totalorder %s47, %s49
      %p56 = scmp.eq.s32.totalorder %s18, 1
      %p57 = por %p55, %p56
      %p58 = scmp.ne.s32.totalorder %s49, %s50
      %p59 = scmp.eq.s32.totalorder %s18, 0
      %p60 = por %p58, %p59
      %p61 = scmp.ne.s32.totalorder %s49, %s50
      %p62 = scmp.eq.s32.totalorder %s19, 1
      %p63 = por %p61, %p62
      %p65 = scmp.ne.s32.totalorder %s50, %s64
      %p66 = scmp.eq.s32.totalorder %s19, 0
      %p67 = por %p65, %p66
      %s69 = sadd.s32 %s68, 1
      %p72 = scmp.eq.s32.totalorder %s13, 1
      %p73 = scmp.ne.s32.totalorder %s68, %s70
      %p74 = scmp.eq.s32.totalorder %s13, 0
      %p75 = por %p73, %p74
      %p76 = scmp.ne.s32.totalorder %s68, %s70
      %p77 = scmp.eq.s32.totalorder %s18, 1
      %p78 = por %p76, %p77
      %p79 = scmp.ne.s32.totalorder %s70, %s71
      %p80 = scmp.eq.s32.totalorder %s18, 0
      %p81 = por %p79, %p80
      %p82 = scmp.ne.s32.totalorder %s70, %s71
      %p83 = scmp.eq.s32.totalorder %s19, 1
      %p84 = por %p82, %p83
      %p86 = scmp.ne.s32.totalorder %s71, %s85
      %p87 = scmp.eq.s32.totalorder %s19, 0
      %p88 = por %p86, %p87
      %s90 = sadd.s32 %s89, 1
      %p93 = scmp.eq.s32.totalorder %s13, 1
      %p94 = scmp.ne.s32.totalorder %s89, %s91
      %p95 = scmp.eq.s32.totalorder %s13, 0
      %p96 = por %p94, %p95
      %p97 = scmp.ne.s32.totalorder %s89, %s91
      %p98 = scmp.eq.s32.totalorder %s18, 1
      %p99 = por %p97, %p98
      %p100 = scmp.ne.s32.totalorder %s91, %s92
      %p101 = scmp.eq.s32.totalorder %s18, 0
      %p102 = por %p100, %p101
      %p103 = scmp.ne.s32.totalorder %s91, %s92
      %p104 = scmp.eq.s32.totalorder %s19, 1
      %p105 = por %p103, %p104
      %p107 = scmp.ne.s32.totalorder %s92, %s106
      %p108 = scmp.eq.s32.totalorder %s19, 0
      %p109 = por %p107, %p108
      %s110 = ssub.s32 %s13, %s20
      %p111 = scmp.eq.s32.totalorder %s110, 0
      %s113 = sadd.s32 %s112, 1
      %s114 = scalar_select %p111, %s112, %s113
      %p117 = pneg %p111
      %p118 = scmp.eq.s32.totalorder %s13, 1
      %p119 = por %p117, %p118
      %p120 = scmp.ne.s32.totalorder %s112, %s115
      %p121 = scmp.eq.s32.totalorder %s13, 0
      %p122 = por %p120, %p121
      %p123 = scmp.ne.s32.totalorder %s112, %s115
      %p124 = scmp.eq.s32.totalorder %s18, 1
      %p125 = por %p123, %p124
      %p126 = scmp.ne.s32.totalorder %s115, %s116
      %p127 = scmp.eq.s32.totalorder %s18, 0
      %p128 = por %p126, %p127
      %p129 = scmp.ne.s32.totalorder %s115, %s116
      %p130 = scmp.eq.s32.totalorder %s19, 1
      %p131 = por %p129, %p130
      %p133 = scmp.ne.s32.totalorder %s116, %s132
      %p134 = scmp.eq.s32.totalorder %s19, 0
      %p135 = por %p133, %p134
      %p136 = scmp.le.s32.totalorder 1, %s13
      %p137 = scmp.lt.s32.totalorder %s13, 3
      %p138 = pnand %p136, %p137
      %p139 = pneg %p138
      // Predicated region
      $region9: #{tpu_custom_call.1} parent=5 // pred_check
        _
      $region10: #{tpu_custom_call.1} parent=5 // pred_check_branch
        %141 = sbr.rel (%p138) target = $region12
      $region11: #{tpu_custom_call.1} parent=5 // pred_region
        %s142 = ssub.s32 %s13, 1
        // Predicated region
        $region13: #{tpu_custom_call.1} parent=11 // pred_check
          %p143 = pneg %p60
        $region14: #{tpu_custom_call.1} parent=11 // pred_check_branch
          %145 = sbr.rel (%p143) target = $region16
        $region15: #{tpu_custom_call.1} parent=11 // pred_region
          _
        $region16: #{tpu_custom_call.1} parent=11 // pred_fallthru
          _
        // Predicated region
        $region17: #{tpu_custom_call.1} parent=11 // pred_check
          %p146 = pneg %p81
        $region18: #{tpu_custom_call.1} parent=11 // pred_check_branch
          %148 = sbr.rel (%p146) target = $region20
        $region19: #{tpu_custom_call.1} parent=11 // pred_region
          _
        $region20: #{tpu_custom_call.1} parent=11 // pred_fallthru
          _
        // Predicated region
        $region21: #{tpu_custom_call.1} parent=11 // pred_check
          %p149 = pneg %p102
        $region22: #{tpu_custom_call.1} parent=11 // pred_check_branch
          %151 = sbr.rel (%p149) target = $region24
        $region23: #{tpu_custom_call.1} parent=11 // pred_region
          _
        $region24: #{tpu_custom_call.1} parent=11 // pred_fallthru
          _
      $region12: #{tpu_custom_call.1} parent=5 // pred_fallthru
        _
      %p152 = scmp.lt.s32.totalorder %s13, 2
      // Predicated region
      $region25: #{tpu_custom_call.1} parent=5 // pred_check
        %p153 = pneg %p152
      $region26: #{tpu_custom_call.1} parent=5 // pred_check_branch
        %155 = sbr.rel (%p153) target = $region28
      $region27: #{tpu_custom_call.1} parent=5 // pred_region
        // Predicated region
        $region29: #{tpu_custom_call.1} parent=27 // pred_check
          %p156 = pneg %p33
        $region30: #{tpu_custom_call.1} parent=27 // pred_check_branch
          %158 = sbr.rel (%p156) target = $region32
        $region31: #{tpu_custom_call.1} parent=27 // pred_region
          %p159 = scmp.lt.s32.totalorder %s13, 1
          %s160 = scalar_select %p159, %s13, 1
          %s161 = smul.addr %s160, 3
          %s162 = smul.addr %s161, 4
          %s163 = scalar_lea.vmem %s0, %s162
        $region32: #{tpu_custom_call.1} parent=27 // pred_fallthru
          _
      $region28: #{tpu_custom_call.1} parent=5 // pred_fallthru
        _
      %p164 = scmp.le.s32.totalorder 1, %s13
      %p165 = scmp.lt.s32.totalorder %s13, 3
      %p166 = pnand %p164, %p165
      %p167 = pneg %p166
      // Predicated region
      $region33: #{tpu_custom_call.1} parent=5 // pred_check
        _
      $region34: #{tpu_custom_call.1} parent=5 // pred_check_branch
        %169 = sbr.rel (%p166) target = $region36
      $region35: #{tpu_custom_call.1} parent=5 // pred_region
        %s170 = ssub.s32 %s13, 1
        %p171 = scmp.lt.s32.totalorder %s18, 1
        %s172 = scalar_select %p171, %s18, 1
        %s173 = smul.addr %s172, 3
        %s174 = smul.addr %s173, 4
        %s175 = scalar_lea.vmem %s0, %s174
        %p176 = pneg %p39
        %p177 = pneg %p36
        %p178 = pneg %p60
        %p179 = pneg %p57
        %p180 = pneg %p81
        %p181 = pneg %p78
        %p182 = pneg %p102
        %p183 = pneg %p99
        %p184 = pneg %p128
        %p185 = pneg %p125
        %s186 = sand.u32 %s115, 1
        %s187 = scalar_lea.sflag [#allocation3], %s186
        %s188 = sand.u32 %s115, 1
        %s189 = smul.addr %s188, 24
        %s190 = scalar_lea.vmem [#allocation2], %s189
        %p191 = scmp.lt.s32.totalorder %s18, 1
        %s192 = scalar_select %p191, %s18, 1
        %s193 = smul.addr %s192, 3
        %s194 = smul.addr %s193, 4
        %s195 = scalar_lea.vmem %s0, %s194
        %v196 = vld [vmem:[%s195] sm:$0xff]
        %v197 = vld [vmem:[%s195 + $0x8] sm:$0xf]
        %v198 = vld [vmem:[%s1] sm:$0xff]
        %s199 = scalar_lea.vmem %s1, 8
        %v200 = vld [vmem:[%s199] sm:$0xff]
        %203 = vst [vmem:[#allocation1] ss:$2 sm:$0xff] %v196
        %s204 = scalar_lea.vmem [#allocation1], 16
        %205 = vst [vmem:[%s204] ss:$2 sm:$0xff] %v197
        %v206 = vld.sshfl [vmem:[#allocation1] sm:$0xff pattern:$0x75316420]
        %v207 = vld.sshfl [vmem:[#allocation1 + $0x8] sm:$0xff pattern:$0x75316420]
        %v208 = vld.sshfl [vmem:[#allocation1 + $0x10] sm:$0xff pattern:$0x75316420]
        %209 = vrot.lane.b32.xlu0 %v206, 127
        %v210 = vpop.permute.xlu0 %209
        %211 = vrot.lane.b32.xlu0 %v207, 127
        %v212 = vpop.permute.xlu0 %211
        %213 = vrot.lane.b32.xlu0 %v208, 127
        %v214 = vpop.permute.xlu0 %213
        %vm215 = vcmask 1039360
        %v216 = vsel %vm215, %v210, %v212
        %v217 = vsel %vm215, %v212, %v214
        %vm218 = vcmask 31744
        %v220 = vsel %vm218, %v200, 0
        %vm222 = vcmask 1043456
        %v223 = vsel %vm222, %v216, 0
        %v225 = vsel %vm222, %v217, 0
        %v227 = vsel %vm222, %v214, 0
        %229 = vmatpush.msra.mxu0 0.0
        %230 = vmatpush.msra.mxu0 0.0
        %231 = vmatpush.msra.mxu0 0.0
        %232 = vmatpush.msra.mxu0 0.0
        %233 = vmatpush.msra.mxu0 0.0
        %234 = vmatpush.msra.mxu0 0.0
        %235 = vmatpush.msra.mxu0 0.0
        %236 = vmatpush.msra.mxu0 0.0
        %237 = vmatpush.msra.mxu0 0.0
        %238 = vmatpush.msra.mxu0 0.0
        %239 = vmatpush.msra.mxu0 0.0
        %240 = vmatpush.msra.mxu0 0.0
        %241 = vmatpush.msra.mxu0 0.0
        %242 = vmatpush.msra.mxu0 0.0
        %243 = vmatpush.msra.mxu0 0.0
        %244 = vmatpush.msra.mxu0 %v223
        %245 = vmatmul.f32.gmra.mxu0 %v220
        %v246 = vpop.f32.mrf.mxu0
        %v247 = vadd.f32 0.0, %v246
        %248 = vdwg.mxu0
        %249 = vmatpush.msra.mxu0 0.0
        %250 = vmatpush.msra.mxu0 0.0
        %251 = vmatpush.msra.mxu0 0.0
        %252 = vmatpush.msra.mxu0 0.0
        %253 = vmatpush.msra.mxu0 0.0
        %254 = vmatpush.msra.mxu0 0.0
        %255 = vmatpush.msra.mxu0 0.0
        %256 = vmatpush.msra.mxu0 0.0
        %257 = vmatpush.msra.mxu0 0.0
        %258 = vmatpush.msra.mxu0 0.0
        %259 = vmatpush.msra.mxu0 0.0
        %260 = vmatpush.msra.mxu0 0.0
        %261 = vmatpush.msra.mxu0 0.0
        %262 = vmatpush.msra.mxu0 0.0
        %263 = vmatpush.msra.mxu0 0.0
        %264 = vmatpush.msra.mxu0 %v225
        %265 = vmatmul.f32.gmra.mxu0 %v220
        %v266 = vpop.f32.mrf.mxu0
        %v267 = vadd.f32 0.0, %v266
        %268 = vdwg.mxu0
        %269 = vmatpush.msra.mxu0 0.0
        %270 = vmatpush.msra.mxu0 0.0
        %271 = vmatpush.msra.mxu0 0.0
        %272 = vmatpush.msra.mxu0 0.0
        %273 = vmatpush.msra.mxu0 0.0
        %274 = vmatpush.msra.mxu0 0.0
        %275 = vmatpush.msra.mxu0 0.0
        %276 = vmatpush.msra.mxu0 0.0
        %277 = vmatpush.msra.mxu0 0.0
        %278 = vmatpush.msra.mxu0 0.0
        %279 = vmatpush.msra.mxu0 0.0
        %280 = vmatpush.msra.mxu0 0.0
        %281 = vmatpush.msra.mxu0 0.0
        %282 = vmatpush.msra.mxu0 0.0
        %283 = vmatpush.msra.mxu0 0.0
        %284 = vmatpush.msra.mxu0 %v227
        %285 = vmatmul.f32.gmra.mxu0 %v220
        %v286 = vpop.f32.mrf.mxu0
        %v287 = vadd.f32 0.0, %v286
        %288 = vdwg.mxu0
        %289 = vst [vmem:[#allocation1] ss:$2 sm:$0xff] %v196
        %s290 = scalar_lea.vmem [#allocation1], 16
        %291 = vst [vmem:[%s290] ss:$2 sm:$0xff] %v197
        %v292 = vld.sshfl [vmem:[#allocation1] sm:$0xff pattern:$0x75316420]
        %v293 = vld.sshfl [vmem:[#allocation1 + $0x8] sm:$0xff pattern:$0x75316420]
        %v294 = vld.sshfl [vmem:[#allocation1 + $0x10] sm:$0xff pattern:$0x75316420]
        %v296 = vsel %vm218, %v198, 0
        %v298 = vsel %vm222, %v292, 0
        %v300 = vsel %vm222, %v293, 0
        %v302 = vsel %vm222, %v294, 0
        %304 = vmatpush.msra.mxu0 0.0
        %305 = vmatpush.msra.mxu0 0.0
        %306 = vmatpush.msra.mxu0 0.0
        %307 = vmatpush.msra.mxu0 0.0
        %308 = vmatpush.msra.mxu0 0.0
        %309 = vmatpush.msra.mxu0 0.0
        %310 = vmatpush.msra.mxu0 0.0
        %311 = vmatpush.msra.mxu0 0.0
        %312 = vmatpush.msra.mxu0 0.0
        %313 = vmatpush.msra.mxu0 0.0
        %314 = vmatpush.msra.mxu0 0.0
        %315 = vmatpush.msra.mxu0 0.0
        %316 = vmatpush.msra.mxu0 0.0
        %317 = vmatpush.msra.mxu0 0.0
        %318 = vmatpush.msra.mxu0 0.0
        %319 = vmatpush.msra.mxu0 %v298
        %320 = vmatmul.f32.gmra.mxu0 %v296
        %v321 = vpop.f32.mrf.mxu0
        %v322 = vadd.f32 %v247, %v321
        %323 = vdwg.mxu0
        %324 = vmatpush.msra.mxu0 0.0
        %325 = vmatpush.msra.mxu0 0.0
        %326 = vmatpush.msra.mxu0 0.0
        %327 = vmatpush.msra.mxu0 0.0
        %328 = vmatpush.msra.mxu0 0.0
        %329 = vmatpush.msra.mxu0 0.0
        %330 = vmatpush.msra.mxu0 0.0
        %331 = vmatpush.msra.mxu0 0.0
        %332 = vmatpush.msra.mxu0 0.0
        %333 = vmatpush.msra.mxu0 0.0
        %334 = vmatpush.msra.mxu0 0.0
        %335 = vmatpush.msra.mxu0 0.0
        %336 = vmatpush.msra.mxu0 0.0
        %337 = vmatpush.msra.mxu0 0.0
        %338 = vmatpush.msra.mxu0 0.0
        %339 = vmatpush.msra.mxu0 %v300
        %340 = vmatmul.f32.gmra.mxu0 %v296
        %v341 = vpop.f32.mrf.mxu0
        %v342 = vadd.f32 %v267, %v341
        %343 = vdwg.mxu0
        %344 = vmatpush.msra.mxu0 0.0
        %345 = vmatpush.msra.mxu0 0.0
        %346 = vmatpush.msra.mxu0 0.0
        %347 = vmatpush.msra.mxu0 0.0
        %348 = vmatpush.msra.mxu0 0.0
        %349 = vmatpush.msra.mxu0 0.0
        %350 = vmatpush.msra.mxu0 0.0
        %351 = vmatpush.msra.mxu0 0.0
        %352 = vmatpush.msra.mxu0 0.0
        %353 = vmatpush.msra.mxu0 0.0
        %354 = vmatpush.msra.mxu0 0.0
        %355 = vmatpush.msra.mxu0 0.0
        %356 = vmatpush.msra.mxu0 0.0
        %357 = vmatpush.msra.mxu0 0.0
        %358 = vmatpush.msra.mxu0 0.0
        %359 = vmatpush.msra.mxu0 %v302
        %360 = vmatmul.f32.gmra.mxu0 %v296
        %v361 = vpop.f32.mrf.mxu0
        %v362 = vadd.f32 %v287, %v361
        %363 = vdwg.mxu0
        %s364 = scalar_lea.vmem %s1, 16
        %v365 = vld [vmem:[%s364] sm:$0xff]
        %366 = vst [vmem:[#allocation1] ss:$2 sm:$0xff] %v196
        %s367 = scalar_lea.vmem [#allocation1], 16
        %368 = vst [vmem:[%s367] ss:$2 sm:$0xff] %v197
        %v369 = vld.sshfl [vmem:[#allocation1] sm:$0xff pattern:$0x75316420]
        %v370 = vld.sshfl [vmem:[#allocation1 + $0x8] sm:$0xff pattern:$0x75316420]
        %v371 = vld.sshfl [vmem:[#allocation1 + $0x10] sm:$0xff pattern:$0x75316420]
        %372 = vrot.lane.b32.xlu0 %v369, 126
        %v373 = vpop.permute.xlu0 %372
        %374 = vrot.lane.b32.xlu0 %v370, 126
        %v375 = vpop.permute.xlu0 %374
        %376 = vrot.lane.b32.xlu0 %v371, 126
        %v377 = vpop.permute.xlu0 %376
        %vm378 = vcmask 1031168
        %v379 = vsel %vm378, %v373, %v375
        %v380 = vsel %vm378, %v375, %v377
        %v382 = vsel %vm218, %v365, 0
        %v384 = vsel %vm222, %v379, 0
        %v386 = vsel %vm222, %v380, 0
        %v388 = vsel %vm222, %v377, 0
        %390 = vmatpush.msra.mxu0 0.0
        %391 = vmatpush.msra.mxu0 0.0
        %392 = vmatpush.msra.mxu0 0.0
        %393 = vmatpush.msra.mxu0 0.0
        %394 = vmatpush.msra.mxu0 0.0
        %395 = vmatpush.msra.mxu0 0.0
        %396 = vmatpush.msra.mxu0 0.0
        %397 = vmatpush.msra.mxu0 0.0
        %398 = vmatpush.msra.mxu0 0.0
        %399 = vmatpush.msra.mxu0 0.0
        %400 = vmatpush.msra.mxu0 0.0
        %401 = vmatpush.msra.mxu0 0.0
        %402 = vmatpush.msra.mxu0 0.0
        %403 = vmatpush.msra.mxu0 0.0
        %404 = vmatpush.msra.mxu0 0.0
        %405 = vmatpush.msra.mxu0 %v384
        %406 = vmatmul.f32.gmra.mxu0 %v382
        %v407 = vpop.f32.mrf.mxu0
        %v408 = vadd.f32 0.0, %v407
        %409 = vdwg.mxu0
        %410 = vmatpush.msra.mxu0 0.0
        %411 = vmatpush.msra.mxu0 0.0
        %412 = vmatpush.msra.mxu0 0.0
        %413 = vmatpush.msra.mxu0 0.0
        %414 = vmatpush.msra.mxu0 0.0
        %415 = vmatpush.msra.mxu0 0.0
        %416 = vmatpush.msra.mxu0 0.0
        %417 = vmatpush.msra.mxu0 0.0
        %418 = vmatpush.msra.mxu0 0.0
        %419 = vmatpush.msra.mxu0 0.0
        %420 = vmatpush.msra.mxu0 0.0
        %421 = vmatpush.msra.mxu0 0.0
        %422 = vmatpush.msra.mxu0 0.0
        %423 = vmatpush.msra.mxu0 0.0
        %424 = vmatpush.msra.mxu0 0.0
        %425 = vmatpush.msra.mxu0 %v386
        %426 = vmatmul.f32.gmra.mxu0 %v382
        %v427 = vpop.f32.mrf.mxu0
        %v428 = vadd.f32 0.0, %v427
        %429 = vdwg.mxu0
        %430 = vmatpush.msra.mxu0 0.0
        %431 = vmatpush.msra.mxu0 0.0
        %432 = vmatpush.msra.mxu0 0.0
        %433 = vmatpush.msra.mxu0 0.0
        %434 = vmatpush.msra.mxu0 0.0
        %435 = vmatpush.msra.mxu0 0.0
        %436 = vmatpush.msra.mxu0 0.0
        %437 = vmatpush.msra.mxu0 0.0
        %438 = vmatpush.msra.mxu0 0.0
        %439 = vmatpush.msra.mxu0 0.0
        %440 = vmatpush.msra.mxu0 0.0
        %441 = vmatpush.msra.mxu0 0.0
        %442 = vmatpush.msra.mxu0 0.0
        %443 = vmatpush.msra.mxu0 0.0
        %444 = vmatpush.msra.mxu0 0.0
        %445 = vmatpush.msra.mxu0 %v388
        %446 = vmatmul.f32.gmra.mxu0 %v382
        %v447 = vpop.f32.mrf.mxu0
        %v448 = vadd.f32 0.0, %v447
        %449 = vdwg.mxu0
        %v450 = vadd.f32 %v322, %v408
        %v451 = vadd.f32 %v342, %v428
        %v452 = vadd.f32 %v362, %v448
        %s453 = scalar_lea.vmem %s1, 24
        %v454 = vld [vmem:[%s453] sm:$0xff]
        %455 = vst [vmem:[#allocation1] ss:$2 sm:$0xff] %v196
        %s456 = scalar_lea.vmem [#allocation1], 16
        %457 = vst [vmem:[%s456] ss:$2 sm:$0xff] %v197
        %v458 = vld.sshfl [vmem:[#allocation1] sm:$0xff pattern:$0x75316420]
        %v459 = vld.sshfl [vmem:[#allocation1 + $0x8] sm:$0xff pattern:$0x75316420]
        %v460 = vld.sshfl [vmem:[#allocation1 + $0x10] sm:$0xff pattern:$0x75316420]
        %461 = vrot.lane.b32.xlu0 %v458, 110
        %v462 = vpop.permute.xlu0 %461
        %463 = vrot.lane.b32.xlu0 %v459, 110
        %v464 = vpop.permute.xlu0 %463
        %465 = vrot.lane.b32.xlu0 %v460, 110
        %v466 = vpop.permute.xlu0 %465
        %vm467 = vcmask 900096
        %v468 = vsel %vm467, %v462, %v464
        %v469 = vsel %vm467, %v464, %v466
        %v471 = vsel %vm218, %v454, 0
        %v473 = vsel %vm222, %v468, 0
        %v475 = vsel %vm222, %v469, 0
        %v477 = vsel %vm222, %v466, 0
        %479 = vmatpush.msra.mxu0 0.0
        %480 = vmatpush.msra.mxu0 0.0
        %481 = vmatpush.msra.mxu0 0.0
        %482 = vmatpush.msra.mxu0 0.0
        %483 = vmatpush.msra.mxu0 0.0
        %484 = vmatpush.msra.mxu0 0.0
        %485 = vmatpush.msra.mxu0 0.0
        %486 = vmatpush.msra.mxu0 0.0
        %487 = vmatpush.msra.mxu0 0.0
        %488 = vmatpush.msra.mxu0 0.0
        %489 = vmatpush.msra.mxu0 0.0
        %490 = vmatpush.msra.mxu0 0.0
        %491 = vmatpush.msra.mxu0 0.0
        %492 = vmatpush.msra.mxu0 0.0
        %493 = vmatpush.msra.mxu0 0.0
        %494 = vmatpush.msra.mxu0 %v473
        %495 = vmatmul.f32.gmra.mxu0 %v471
        %v496 = vpop.f32.mrf.mxu0
        %v497 = vadd.f32 0.0, %v496
        %498 = vdwg.mxu0
        %499 = vmatpush.msra.mxu0 0.0
        %500 = vmatpush.msra.mxu0 0.0
        %501 = vmatpush.msra.mxu0 0.0
        %502 = vmatpush.msra.mxu0 0.0
        %503 = vmatpush.msra.mxu0 0.0
        %504 = vmatpush.msra.mxu0 0.0
        %505 = vmatpush.msra.mxu0 0.0
        %506 = vmatpush.msra.mxu0 0.0
        %507 = vmatpush.msra.mxu0 0.0
        %508 = vmatpush.msra.mxu0 0.0
        %509 = vmatpush.msra.mxu0 0.0
        %510 = vmatpush.msra.mxu0 0.0
        %511 = vmatpush.msra.mxu0 0.0
        %512 = vmatpush.msra.mxu0 0.0
        %513 = vmatpush.msra.mxu0 0.0
        %514 = vmatpush.msra.mxu0 %v475
        %515 = vmatmul.f32.gmra.mxu0 %v471
        %v516 = vpop.f32.mrf.mxu0
        %v517 = vadd.f32 0.0, %v516
        %518 = vdwg.mxu0
        %519 = vmatpush.msra.mxu0 0.0
        %520 = vmatpush.msra.mxu0 0.0
        %521 = vmatpush.msra.mxu0 0.0
        %522 = vmatpush.msra.mxu0 0.0
        %523 = vmatpush.msra.mxu0 0.0
        %524 = vmatpush.msra.mxu0 0.0
        %525 = vmatpush.msra.mxu0 0.0
        %526 = vmatpush.msra.mxu0 0.0
        %527 = vmatpush.msra.mxu0 0.0
        %528 = vmatpush.msra.mxu0 0.0
        %529 = vmatpush.msra.mxu0 0.0
        %530 = vmatpush.msra.mxu0 0.0
        %531 = vmatpush.msra.mxu0 0.0
        %532 = vmatpush.msra.mxu0 0.0
        %533 = vmatpush.msra.mxu0 0.0
        %534 = vmatpush.msra.mxu0 %v477
        %535 = vmatmul.f32.gmra.mxu0 %v471
        %v536 = vpop.f32.mrf.mxu0
        %v537 = vadd.f32 0.0, %v536
        %538 = vdwg.mxu0
        %v539 = vadd.f32 %v450, %v497
        %v540 = vadd.f32 %v451, %v517
        %v541 = vadd.f32 %v452, %v537
        %s542 = scalar_lea.vmem %s1, 32
        %v543 = vld [vmem:[%s542] sm:$0xff]
        %544 = vst [vmem:[#allocation1] ss:$2 sm:$0xff] %v196
        %s545 = scalar_lea.vmem [#allocation1], 16
        %546 = vst [vmem:[%s545] ss:$2 sm:$0xff] %v197
        %v547 = vld.sshfl [vmem:[#allocation1] sm:$0xff pattern:$0x75316420]
        %v548 = vld.sshfl [vmem:[#allocation1 + $0x8] sm:$0xff pattern:$0x75316420]
        %v549 = vld.sshfl [vmem:[#allocation1 + $0x10] sm:$0xff pattern:$0x75316420]
        %550 = vrot.lane.b32.xlu0 %v547, 109
        %v551 = vpop.permute.xlu0 %550
        %552 = vrot.lane.b32.xlu0 %v548, 109
        %v553 = vpop.permute.xlu0 %552
        %554 = vrot.lane.b32.xlu0 %v549, 109
        %v555 = vpop.permute.xlu0 %554
        %vm556 = vcmask 891904
        %v557 = vsel %vm556, %v551, %v553
        %v558 = vsel %vm556, %v553, %v555
        %v560 = vsel %vm218, %v543, 0
        %v562 = vsel %vm222, %v557, 0
        %v564 = vsel %vm222, %v558, 0
        %v566 = vsel %vm222, %v555, 0
        %568 = vmatpush.msra.mxu0 0.0
        %569 = vmatpush.msra.mxu0 0.0
        %570 = vmatpush.msra.mxu0 0.0
        %571 = vmatpush.msra.mxu0 0.0
        %572 = vmatpush.msra.mxu0 0.0
        %573 = vmatpush.msra.mxu0 0.0
        %574 = vmatpush.msra.mxu0 0.0
        %575 = vmatpush.msra.mxu0 0.0
        %576 = vmatpush.msra.mxu0 0.0
        %577 = vmatpush.msra.mxu0 0.0
        %578 = vmatpush.msra.mxu0 0.0
        %579 = vmatpush.msra.mxu0 0.0
        %580 = vmatpush.msra.mxu0 0.0
        %581 = vmatpush.msra.mxu0 0.0
        %582 = vmatpush.msra.mxu0 0.0
        %583 = vmatpush.msra.mxu0 %v562
        %584 = vmatmul.f32.gmra.mxu0 %v560
        %v585 = vpop.f32.mrf.mxu0
        %v586 = vadd.f32 0.0, %v585
        %587 = vdwg.mxu0
        %588 = vmatpush.msra.mxu0 0.0
        %589 = vmatpush.msra.mxu0 0.0
        %590 = vmatpush.msra.mxu0 0.0
        %591 = vmatpush.msra.mxu0 0.0
        %592 = vmatpush.msra.mxu0 0.0
        %593 = vmatpush.msra.mxu0 0.0
        %594 = vmatpush.msra.mxu0 0.0
        %595 = vmatpush.msra.mxu0 0.0
        %596 = vmatpush.msra.mxu0 0.0
        %597 = vmatpush.msra.mxu0 0.0
        %598 = vmatpush.msra.mxu0 0.0
        %599 = vmatpush.msra.mxu0 0.0
        %600 = vmatpush.msra.mxu0 0.0
        %601 = vmatpush.msra.mxu0 0.0
        %602 = vmatpush.msra.mxu0 0.0
        %603 = vmatpush.msra.mxu0 %v564
        %604 = vmatmul.f32.gmra.mxu0 %v560
        %v605 = vpop.f32.mrf.mxu0
        %v606 = vadd.f32 0.0, %v605
        %607 = vdwg.mxu0
        %608 = vmatpush.msra.mxu0 0.0
        %609 = vmatpush.msra.mxu0 0.0
        %610 = vmatpush.msra.mxu0 0.0
        %611 = vmatpush.msra.mxu0 0.0
        %612 = vmatpush.msra.mxu0 0.0
        %613 = vmatpush.msra.mxu0 0.0
        %614 = vmatpush.msra.mxu0 0.0
        %615 = vmatpush.msra.mxu0 0.0
        %616 = vmatpush.msra.mxu0 0.0
        %617 = vmatpush.msra.mxu0 0.0
        %618 = vmatpush.msra.mxu0 0.0
        %619 = vmatpush.msra.mxu0 0.0
        %620 = vmatpush.msra.mxu0 0.0
        %621 = vmatpush.msra.mxu0 0.0
        %622 = vmatpush.msra.mxu0 0.0
        %623 = vmatpush.msra.mxu0 %v566
        %624 = vmatmul.f32.gmra.mxu0 %v560
        %v625 = vpop.f32.mrf.mxu0
        %v626 = vadd.f32 0.0, %v625
        %627 = vdwg.mxu0
        %v628 = vadd.f32 %v539, %v586
        %v629 = vadd.f32 %v540, %v606
        %v630 = vadd.f32 %v541, %v626
        %s631 = scalar_lea.vmem %s1, 40
        %v632 = vld [vmem:[%s631] sm:$0xff]
        %633 = vst [vmem:[#allocation1] ss:$2 sm:$0xff] %v196
        %s634 = scalar_lea.vmem [#allocation1], 16
        %635 = vst [vmem:[%s634] ss:$2 sm:$0xff] %v197
        %v636 = vld.sshfl [vmem:[#allocation1] sm:$0xff pattern:$0x75316420]
        %v637 = vld.sshfl [vmem:[#allocation1 + $0x8] sm:$0xff pattern:$0x75316420]
        %v638 = vld.sshfl [vmem:[#allocation1 + $0x10] sm:$0xff pattern:$0x75316420]
        %639 = vrot.lane.b32.xlu0 %v636, 108
        %v640 = vpop.permute.xlu0 %639
        %641 = vrot.lane.b32.xlu0 %v637, 108
        %v642 = vpop.permute.xlu0 %641
        %643 = vrot.lane.b32.xlu0 %v638, 108
        %v644 = vpop.permute.xlu0 %643
        %vm645 = vcmask 883712
        %v646 = vsel %vm645, %v640, %v642
        %v647 = vsel %vm645, %v642, %v644
        %v649 = vsel %vm218, %v632, 0
        %v651 = vsel %vm222, %v646, 0
        %v653 = vsel %vm222, %v647, 0
        %v655 = vsel %vm222, %v644, 0
        %657 = vmatpush.msra.mxu0 0.0
        %658 = vmatpush.msra.mxu0 0.0
        %659 = vmatpush.msra.mxu0 0.0
        %660 = vmatpush.msra.mxu0 0.0
        %661 = vmatpush.msra.mxu0 0.0
        %662 = vmatpush.msra.mxu0 0.0
        %663 = vmatpush.msra.mxu0 0.0
        %664 = vmatpush.msra.mxu0 0.0
        %665 = vmatpush.msra.mxu0 0.0
        %666 = vmatpush.msra.mxu0 0.0
        %667 = vmatpush.msra.mxu0 0.0
        %668 = vmatpush.msra.mxu0 0.0
        %669 = vmatpush.msra.mxu0 0.0
        %670 = vmatpush.msra.mxu0 0.0
        %671 = vmatpush.msra.mxu0 0.0
        %672 = vmatpush.msra.mxu0 %v651
        %673 = vmatmul.f32.gmra.mxu0 %v649
        %v674 = vpop.f32.mrf.mxu0
        %v675 = vadd.f32 0.0, %v674
        %676 = vdwg.mxu0
        %677 = vmatpush.msra.mxu0 0.0
        %678 = vmatpush.msra.mxu0 0.0
        %679 = vmatpush.msra.mxu0 0.0
        %680 = vmatpush.msra.mxu0 0.0
        %681 = vmatpush.msra.mxu0 0.0
        %682 = vmatpush.msra.mxu0 0.0
        %683 = vmatpush.msra.mxu0 0.0
        %684 = vmatpush.msra.mxu0 0.0
        %685 = vmatpush.msra.mxu0 0.0
        %686 = vmatpush.msra.mxu0 0.0
        %687 = vmatpush.msra.mxu0 0.0
        %688 = vmatpush.msra.mxu0 0.0
        %689 = vmatpush.msra.mxu0 0.0
        %690 = vmatpush.msra.mxu0 0.0
        %691 = vmatpush.msra.mxu0 0.0
        %692 = vmatpush.msra.mxu0 %v653
        %693 = vmatmul.f32.gmra.mxu0 %v649
        %v694 = vpop.f32.mrf.mxu0
        %v695 = vadd.f32 0.0, %v694
        %696 = vdwg.mxu0
        %697 = vmatpush.msra.mxu0 0.0
        %698 = vmatpush.msra.mxu0 0.0
        %699 = vmatpush.msra.mxu0 0.0
        %700 = vmatpush.msra.mxu0 0.0
        %701 = vmatpush.msra.mxu0 0.0
        %702 = vmatpush.msra.mxu0 0.0
        %703 = vmatpush.msra.mxu0 0.0
        %704 = vmatpush.msra.mxu0 0.0
        %705 = vmatpush.msra.mxu0 0.0
        %706 = vmatpush.msra.mxu0 0.0
        %707 = vmatpush.msra.mxu0 0.0
        %708 = vmatpush.msra.mxu0 0.0
        %709 = vmatpush.msra.mxu0 0.0
        %710 = vmatpush.msra.mxu0 0.0
        %711 = vmatpush.msra.mxu0 0.0
        %712 = vmatpush.msra.mxu0 %v655
        %713 = vmatmul.f32.gmra.mxu0 %v649
        %v714 = vpop.f32.mrf.mxu0
        %v715 = vadd.f32 0.0, %v714
        %716 = vdwg.mxu0
        %v717 = vadd.f32 %v628, %v675
        %v718 = vadd.f32 %v629, %v695
        %v719 = vadd.f32 %v630, %v715
        %s720 = scalar_lea.vmem %s1, 48
        %v721 = vld [vmem:[%s720] sm:$0xff]
        %722 = vst [vmem:[#allocation1] ss:$2 sm:$0xff] %v196
        %s723 = scalar_lea.vmem [#allocation1], 16
        %724 = vst [vmem:[%s723] ss:$2 sm:$0xff] %v197
        %v725 = vld.sshfl [vmem:[#allocation1] sm:$0xff pattern:$0x75316420]
        %v726 = vld.sshfl [vmem:[#allocation1 + $0x8] sm:$0xff pattern:$0x75316420]
        %v727 = vld.sshfl [vmem:[#allocation1 + $0x10] sm:$0xff pattern:$0x75316420]
        %728 = vrot.lane.b32.xlu0 %v725, 92
        %v729 = vpop.permute.xlu0 %728
        %730 = vrot.lane.b32.xlu0 %v726, 92
        %v731 = vpop.permute.xlu0 %730
        %732 = vrot.lane.b32.xlu0 %v727, 92
        %v733 = vpop.permute.xlu0 %732
        %vm734 = vcmask 752640
        %v735 = vsel %vm734, %v729, %v731
        %v736 = vsel %vm734, %v731, %v733
        %v738 = vsel %vm218, %v721, 0
        %v740 = vsel %vm222, %v735, 0
        %v742 = vsel %vm222, %v736, 0
        %v744 = vsel %vm222, %v733, 0
        %746 = vmatpush.msra.mxu0 0.0
        %747 = vmatpush.msra.mxu0 0.0
        %748 = vmatpush.msra.mxu0 0.0
        %749 = vmatpush.msra.mxu0 0.0
        %750 = vmatpush.msra.mxu0 0.0
        %751 = vmatpush.msra.mxu0 0.0
        %752 = vmatpush.msra.mxu0 0.0
        %753 = vmatpush.msra.mxu0 0.0
        %754 = vmatpush.msra.mxu0 0.0
        %755 = vmatpush.msra.mxu0 0.0
        %756 = vmatpush.msra.mxu0 0.0
        %757 = vmatpush.msra.mxu0 0.0
        %758 = vmatpush.msra.mxu0 0.0
        %759 = vmatpush.msra.mxu0 0.0
        %760 = vmatpush.msra.mxu0 0.0
        %761 = vmatpush.msra.mxu0 %v740
        %762 = vmatmul.f32.gmra.mxu0 %v738
        %v763 = vpop.f32.mrf.mxu0
        %v764 = vadd.f32 0.0, %v763
        %765 = vdwg.mxu0
        %766 = vmatpush.msra.mxu0 0.0
        %767 = vmatpush.msra.mxu0 0.0
        %768 = vmatpush.msra.mxu0 0.0
        %769 = vmatpush.msra.mxu0 0.0
        %770 = vmatpush.msra.mxu0 0.0
        %771 = vmatpush.msra.mxu0 0.0
        %772 = vmatpush.msra.mxu0 0.0
        %773 = vmatpush.msra.mxu0 0.0
        %774 = vmatpush.msra.mxu0 0.0
        %775 = vmatpush.msra.mxu0 0.0
        %776 = vmatpush.msra.mxu0 0.0
        %777 = vmatpush.msra.mxu0 0.0
        %778 = vmatpush.msra.mxu0 0.0
        %779 = vmatpush.msra.mxu0 0.0
        %780 = vmatpush.msra.mxu0 0.0
        %781 = vmatpush.msra.mxu0 %v742
        %782 = vmatmul.f32.gmra.mxu0 %v738
        %v783 = vpop.f32.mrf.mxu0
        %v784 = vadd.f32 0.0, %v783
        %785 = vdwg.mxu0
        %786 = vmatpush.msra.mxu0 0.0
        %787 = vmatpush.msra.mxu0 0.0
        %788 = vmatpush.msra.mxu0 0.0
        %789 = vmatpush.msra.mxu0 0.0
        %790 = vmatpush.msra.mxu0 0.0
        %791 = vmatpush.msra.mxu0 0.0
        %792 = vmatpush.msra.mxu0 0.0
        %793 = vmatpush.msra.mxu0 0.0
        %794 = vmatpush.msra.mxu0 0.0
        %795 = vmatpush.msra.mxu0 0.0
        %796 = vmatpush.msra.mxu0 0.0
        %797 = vmatpush.msra.mxu0 0.0
        %798 = vmatpush.msra.mxu0 0.0
        %799 = vmatpush.msra.mxu0 0.0
        %800 = vmatpush.msra.mxu0 0.0
        %801 = vmatpush.msra.mxu0 %v744
        %802 = vmatmul.f32.gmra.mxu0 %v738
        %v803 = vpop.f32.mrf.mxu0
        %v804 = vadd.f32 0.0, %v803
        %805 = vdwg.mxu0
        %v806 = vadd.f32 %v717, %v764
        %v807 = vadd.f32 %v718, %v784
        %v808 = vadd.f32 %v719, %v804
        %s809 = scalar_lea.vmem %s1, 56
        %v810 = vld [vmem:[%s809] sm:$0xff]
        %811 = vst [vmem:[#allocation1] ss:$2 sm:$0xff] %v196
        %s812 = scalar_lea.vmem [#allocation1], 16
        %813 = vst [vmem:[%s812] ss:$2 sm:$0xff] %v197
        %v814 = vld.sshfl [vmem:[#allocation1] sm:$0xff pattern:$0x75316420]
        %v815 = vld.sshfl [vmem:[#allocation1 + $0x8] sm:$0xff pattern:$0x75316420]
        %v816 = vld.sshfl [vmem:[#allocation1 + $0x10] sm:$0xff pattern:$0x75316420]
        %817 = vrot.lane.b32.xlu0 %v814, 91
        %v818 = vpop.permute.xlu0 %817
        %819 = vrot.lane.b32.xlu0 %v815, 91
        %v820 = vpop.permute.xlu0 %819
        %821 = vrot.lane.b32.xlu0 %v816, 91
        %v822 = vpop.permute.xlu0 %821
        %vm823 = vcmask 744448
        %v824 = vsel %vm823, %v818, %v820
        %v825 = vsel %vm823, %v820, %v822
        %v827 = vsel %vm218, %v810, 0
        %v829 = vsel %vm222, %v824, 0
        %v831 = vsel %vm222, %v825, 0
        %v833 = vsel %vm222, %v822, 0
        %835 = vmatpush.msra.mxu0 0.0
        %836 = vmatpush.msra.mxu0 0.0
        %837 = vmatpush.msra.mxu0 0.0
        %838 = vmatpush.msra.mxu0 0.0
        %839 = vmatpush.msra.mxu0 0.0
        %840 = vmatpush.msra.mxu0 0.0
        %841 = vmatpush.msra.mxu0 0.0
        %842 = vmatpush.msra.mxu0 0.0
        %843 = vmatpush.msra.mxu0 0.0
        %844 = vmatpush.msra.mxu0 0.0
        %845 = vmatpush.msra.mxu0 0.0
        %846 = vmatpush.msra.mxu0 0.0
        %847 = vmatpush.msra.mxu0 0.0
        %848 = vmatpush.msra.mxu0 0.0
        %849 = vmatpush.msra.mxu0 0.0
        %850 = vmatpush.msra.mxu0 %v829
        %851 = vmatmul.f32.gmra.mxu0 %v827
        %v852 = vpop.f32.mrf.mxu0
        %v853 = vadd.f32 0.0, %v852
        %854 = vdwg.mxu0
        %855 = vmatpush.msra.mxu0 0.0
        %856 = vmatpush.msra.mxu0 0.0
        %857 = vmatpush.msra.mxu0 0.0
        %858 = vmatpush.msra.mxu0 0.0
        %859 = vmatpush.msra.mxu0 0.0
        %860 = vmatpush.msra.mxu0 0.0
        %861 = vmatpush.msra.mxu0 0.0
        %862 = vmatpush.msra.mxu0 0.0
        %863 = vmatpush.msra.mxu0 0.0
        %864 = vmatpush.msra.mxu0 0.0
        %865 = vmatpush.msra.mxu0 0.0
        %866 = vmatpush.msra.mxu0 0.0
        %867 = vmatpush.msra.mxu0 0.0
        %868 = vmatpush.msra.mxu0 0.0
        %869 = vmatpush.msra.mxu0 0.0
        %870 = vmatpush.msra.mxu0 %v831
        %871 = vmatmul.f32.gmra.mxu0 %v827
        %v872 = vpop.f32.mrf.mxu0
        %v873 = vadd.f32 0.0, %v872
        %874 = vdwg.mxu0
        %875 = vmatpush.msra.mxu0 0.0
        %876 = vmatpush.msra.mxu0 0.0
        %877 = vmatpush.msra.mxu0 0.0
        %878 = vmatpush.msra.mxu0 0.0
        %879 = vmatpush.msra.mxu0 0.0
        %880 = vmatpush.msra.mxu0 0.0
        %881 = vmatpush.msra.mxu0 0.0
        %882 = vmatpush.msra.mxu0 0.0
        %883 = vmatpush.msra.mxu0 0.0
        %884 = vmatpush.msra.mxu0 0.0
        %885 = vmatpush.msra.mxu0 0.0
        %886 = vmatpush.msra.mxu0 0.0
        %887 = vmatpush.msra.mxu0 0.0
        %888 = vmatpush.msra.mxu0 0.0
        %889 = vmatpush.msra.mxu0 0.0
        %890 = vmatpush.msra.mxu0 %v833
        %891 = vmatmul.f32.gmra.mxu0 %v827
        %v892 = vpop.f32.mrf.mxu0
        %v893 = vadd.f32 0.0, %v892
        %894 = vdwg.mxu0
        %v895 = vadd.f32 %v806, %v853
        %v896 = vadd.f32 %v807, %v873
        %v897 = vadd.f32 %v808, %v893
        %s898 = scalar_lea.vmem %s1, 64
        %v899 = vld [vmem:[%s898] sm:$0xff]
        %900 = vst [vmem:[#allocation1] ss:$2 sm:$0xff] %v196
        %s901 = scalar_lea.vmem [#allocation1], 16
        %902 = vst [vmem:[%s901] ss:$2 sm:$0xff] %v197
        %v903 = vld.sshfl [vmem:[#allocation1] sm:$0xff pattern:$0x75316420]
        %v904 = vld.sshfl [vmem:[#allocation1 + $0x8] sm:$0xff pattern:$0x75316420]
        %v905 = vld.sshfl [vmem:[#allocation1 + $0x10] sm:$0xff pattern:$0x75316420]
        %906 = vrot.lane.b32.xlu0 %v903, 90
        %v907 = vpop.permute.xlu0 %906
        %908 = vrot.lane.b32.xlu0 %v904, 90
        %v909 = vpop.permute.xlu0 %908
        %910 = vrot.lane.b32.xlu0 %v905, 90
        %v911 = vpop.permute.xlu0 %910
        %vm912 = vcmask 736256
        %v913 = vsel %vm912, %v907, %v909
        %v914 = vsel %vm912, %v909, %v911
        %v916 = vsel %vm218, %v899, 0
        %v918 = vsel %vm222, %v913, 0
        %v920 = vsel %vm222, %v914, 0
        %v922 = vsel %vm222, %v911, 0
        %924 = vmatpush.msra.mxu0 0.0
        %925 = vmatpush.msra.mxu0 0.0
        %926 = vmatpush.msra.mxu0 0.0
        %927 = vmatpush.msra.mxu0 0.0
        %928 = vmatpush.msra.mxu0 0.0
        %929 = vmatpush.msra.mxu0 0.0
        %930 = vmatpush.msra.mxu0 0.0
        %931 = vmatpush.msra.mxu0 0.0
        %932 = vmatpush.msra.mxu0 0.0
        %933 = vmatpush.msra.mxu0 0.0
        %934 = vmatpush.msra.mxu0 0.0
        %935 = vmatpush.msra.mxu0 0.0
        %936 = vmatpush.msra.mxu0 0.0
        %937 = vmatpush.msra.mxu0 0.0
        %938 = vmatpush.msra.mxu0 0.0
        %939 = vmatpush.msra.mxu0 %v918
        %940 = vmatmul.f32.gmra.mxu0 %v916
        %v941 = vpop.f32.mrf.mxu0
        %v942 = vadd.f32 0.0, %v941
        %943 = vdwg.mxu0
        %944 = vmatpush.msra.mxu0 0.0
        %945 = vmatpush.msra.mxu0 0.0
        %946 = vmatpush.msra.mxu0 0.0
        %947 = vmatpush.msra.mxu0 0.0
        %948 = vmatpush.msra.mxu0 0.0
        %949 = vmatpush.msra.mxu0 0.0
        %950 = vmatpush.msra.mxu0 0.0
        %951 = vmatpush.msra.mxu0 0.0
        %952 = vmatpush.msra.mxu0 0.0
        %953 = vmatpush.msra.mxu0 0.0
        %954 = vmatpush.msra.mxu0 0.0
        %955 = vmatpush.msra.mxu0 0.0
        %956 = vmatpush.msra.mxu0 0.0
        %957 = vmatpush.msra.mxu0 0.0
        %958 = vmatpush.msra.mxu0 0.0
        %959 = vmatpush.msra.mxu0 %v920
        %960 = vmatmul.f32.gmra.mxu0 %v916
        %v961 = vpop.f32.mrf.mxu0
        %v962 = vadd.f32 0.0, %v961
        %963 = vdwg.mxu0
        %964 = vmatpush.msra.mxu0 0.0
        %965 = vmatpush.msra.mxu0 0.0
        %966 = vmatpush.msra.mxu0 0.0
        %967 = vmatpush.msra.mxu0 0.0
        %968 = vmatpush.msra.mxu0 0.0
        %969 = vmatpush.msra.mxu0 0.0
        %970 = vmatpush.msra.mxu0 0.0
        %971 = vmatpush.msra.mxu0 0.0
        %972 = vmatpush.msra.mxu0 0.0
        %973 = vmatpush.msra.mxu0 0.0
        %974 = vmatpush.msra.mxu0 0.0
        %975 = vmatpush.msra.mxu0 0.0
        %976 = vmatpush.msra.mxu0 0.0
        %977 = vmatpush.msra.mxu0 0.0
        %978 = vmatpush.msra.mxu0 0.0
        %979 = vmatpush.msra.mxu0 %v922
        %980 = vmatmul.f32.gmra.mxu0 %v916
        %v981 = vpop.f32.mrf.mxu0
        %v982 = vadd.f32 0.0, %v981
        %983 = vdwg.mxu0
        %v984 = vadd.f32 %v895, %v942
        %v985 = vadd.f32 %v896, %v962
        %v986 = vadd.f32 %v897, %v982
        %v987 = vld [vmem:[%s2] sm:$0xff]
        %989 = vset.pattern.permute.xlu0 0
        %990 = vperm.xlu0 %989, %v987
        %v991 = vpop.permute.xlu0 %990
        %v993 = vadd.f32 %v984, %v991
        %v994 = vadd.f32 %v985, %v991
        %v995 = vadd.f32 %v986, %v991
        %v996 = vmax.f32 %v993, 0.0
        %v997 = vmax.f32 %v994, 0.0
        %v998 = vmax.f32 %v995, 0.0
        %v999 = vld [vmem:[%s3] sm:$0x7]
        %v1001 = vperm.slane %v999, 0
        %v1002 = vperm.slane %v999, 1
        %v1003 = vperm.slane %v999, 2
        %v1007 = vmul.f32 %v996, %v1001
        %v1008 = vmul.f32 %v997, %v1002
        %v1009 = vmul.f32 %v998, %v1003
        %1010 = vst [vmem:[%s190] sm:$0xff] 0.0
        %1011 = vst [vmem:[%s190 + $0x8] sm:$0xff] 0.0
        %1012 = vst [vmem:[%s190 + $0x10] sm:$0xff] 0.0
        %1016 = vrot.lane.b32.xlu0 %v1007, 19
        %v1017 = vpop.permute.xlu0 %1016
        %1018 = vrot.lane.b32.xlu0 %v1008, 19
        %v1019 = vpop.permute.xlu0 %1018
        %1020 = vrot.lane.b32.xlu0 %v1009, 19
        %v1021 = vpop.permute.xlu0 %1020
        %vm1022 = vcmask 154624
        %v1023 = vsel %vm1022, %v1017, %v1019
        %v1024 = vsel %vm1022, %v1019, %v1021
        %vm1028 = vcmask 1047704
        %1029 = vst.msk [vmem:[%s190] sm:$0xff] %vm1028, %v1017
        %1030 = vst [vmem:[%s190 + $0x8] sm:$0xff] %v1023
        %vm1031 = vcmask 400384
        %1032 = vst.msk [vmem:[%s190 + $0x10] sm:$0xff] %vm1031, %v1024
        %s1033 = sand.u32 %s115, 1
        %s1034 = scalar_lea.sflag [#allocation3], %s1033
        %s1035 = sand.u32 %s115, 1
        %s1036 = smul.addr %s1035, 24
        %s1037 = scalar_lea.vmem [#allocation2], %s1036
        // Predicated region
        $region37: #{tpu_custom_call.1} parent=35 // pred_check
          %p1038 = pneg %p125
        $region38: #{tpu_custom_call.1} parent=35 // pred_check_branch
          %1040 = sbr.rel (%p1038) target = $region40
        $region39: #{tpu_custom_call.1} parent=35 // pred_region
          %1042 = vsyncadd %s1034, 0
          %s1043 = smul.addr %s18, 3
          %s1044 = smul.addr %s1043, 8
          %s1045 = scalar_lea.hbm %s4, %s1044
          %s1047 = sshll.u32 %s1037, 4
          %s1048 = int_to_ptr.vmem [resolvable:$true] %s1047
          %s1049 = sshll.u32 %s1045, 4
          %s1050 = int_to_ptr.hbm [resolvable:$true] %s1049
          %1052 = dma.vmem_to_hbm [thread:$0]  %s1048, 384, %s1050, %s1034
        $region40: #{tpu_custom_call.1} parent=35 // pred_fallthru
          _
      $region36: #{tpu_custom_call.1} parent=5 // pred_fallthru
        _
      %p1053 = scmp.le.s32.totalorder 2, %s13
      // Predicated region
      $region41: #{tpu_custom_call.1} parent=5 // pred_check
        %p1054 = pneg %p1053
      $region42: #{tpu_custom_call.1} parent=5 // pred_check_branch
        %1056 = sbr.rel (%p1054) target = $region44
      $region43: #{tpu_custom_call.1} parent=5 // pred_region
        %s1057 = ssub.s32 %s13, 2
        // Predicated region
        $region45: #{tpu_custom_call.1} parent=43 // pred_check
          %p1058 = pneg %p131
        $region46: #{tpu_custom_call.1} parent=43 // pred_check_branch
          %1060 = sbr.rel (%p1058) target = $region48
        $region47: #{tpu_custom_call.1} parent=43 // pred_region
          %s1061 = sand.u32 %s116, 1
          %s1062 = scalar_lea.sflag [#allocation3], %s1061
          %s1063 = sand.u32 %s116, 1
          %s1064 = smul.addr %s1063, 24
          %s1065 = scalar_lea.vmem [#allocation2], %s1064
          %1067 = dma.done %s1062, 384
        $region48: #{tpu_custom_call.1} parent=43 // pred_fallthru
          _
      $region44: #{tpu_custom_call.1} parent=5 // pred_fallthru
        _
    $region6: #{tpu_custom_call.1} parent=1 // loop_footer
      %s17 = sadd.s32 1, %s13
    $region7: #{tpu_custom_call.1} parent=1 // loop_footer_branch
      %12 = sbr.rel target = $region3
    $region8: #{tpu_custom_call.1} parent=1 // loop_exit
      _
    %1068 = vsyncpa [#allocation3], 1
    %s1069 = scalar_lea.sflag [#allocation3], 1
    %1070 = vsyncpa %s1069, 1

</llo_original>
